<compile_context>
chip_gen: v6e
topology: v6e:2x2x1
jax: 0.10.0
libtpu: 0.0.40
codegen_flags: <defaults>
</compile_context>

<pallas_src>
import jax
import jax.numpy as jnp
from jax.experimental import pallas as pl
from jax.experimental.pallas import tpu as pltpu

NUM_INPUTS = 28 * 28   # 784
NUM_HIDDEN = 100
NUM_OUTPUTS = 10

# Lane-aligned (padded) feature sizes for the small dims.
H_PAD = 128
O_PAD = 128


def _round_up(n, m):
    return ((n + m - 1) // m) * m


def mlp_kernel(x_ref, w1_ref, b1_ref, w2_ref, b2_ref, o_ref):
    # x arrives as f32 from HBM; cast to bf16 in-kernel for the MXU (no extra
    # HBM pass). f32 accumulation; bias add + tanh in f32 (VPU/EUP).
    x = x_ref[...].astype(jnp.bfloat16)
    h = jnp.dot(x, w1_ref[...], preferred_element_type=jnp.float32)
    h = jnp.tanh(h + b1_ref[...])                        # b1 is (1, H_PAD) -> broadcasts
    y = jnp.dot(h.astype(jnp.bfloat16), w2_ref[...],
                preferred_element_type=jnp.float32)
    o_ref[...] = jnp.tanh(y + b2_ref[...]).astype(o_ref.dtype)


def prepare_params(w1, b1, w2, b2):
    """Pad/cast weights once (call at init, not per forward).

    Zero padding keeps the math identical: padded hidden columns produce
    tanh(0)=0 activations which hit all-zero w2 rows; padded output columns
    are sliced off after the call.
    """
    K, H = w1.shape
    O = w2.shape[1]
    w1_p = jnp.pad(w1.astype(jnp.bfloat16), ((0, 0), (0, H_PAD - H)))       # (784, 128)
    b1_p = jnp.pad(b1.astype(jnp.float32), (0, H_PAD - H)).reshape(1, H_PAD)
    w2_p = jnp.pad(w2.astype(jnp.bfloat16), ((0, H_PAD - H), (0, O_PAD - O)))  # (128, 128)
    b2_p = jnp.pad(b2.astype(jnp.float32), (0, O_PAD - O)).reshape(1, O_PAD)
    return w1_p, b1_p, w2_p, b2_p


def net_forward(x, prepared_params, *, block_b=512, num_outputs=NUM_OUTPUTS):
    """Pallas forward for Net: tanh(tanh(x @ w1 + b1) @ w2 + b2).

    x: (B, 784) float32. prepared_params from prepare_params().
    block_b: batch tile (512 is a good default on v5e/v6e; v7x can use 1024).
    """
    w1_p, b1_p, w2_p, b2_p = prepared_params
    B, K = x.shape

    # Batch tile: multiple of 16 (bf16 sublane packing). No batch padding of x;
    # the partial last grid block is handled by masked edge loads/stores.
    TB = min(block_b, _round_up(B, 16))
    grid = (pl.cdiv(B, TB),)

    out_padded = pl.pallas_call(
        mlp_kernel,
        out_shape=jax.ShapeDtypeStruct((B, O_PAD), jnp.bfloat16),
        grid_spec=pltpu.PrefetchScalarGridSpec(
            num_scalar_prefetch=0,
            grid=grid,
            in_specs=[
                pl.BlockSpec((TB, K), lambda i: (i, 0)),        # x: tiled over batch, full K
                pl.BlockSpec((K, H_PAD), lambda i: (0, 0)),     # w1: VMEM-resident
                pl.BlockSpec((1, H_PAD), lambda i: (0, 0)),     # b1: resident
                pl.BlockSpec((H_PAD, O_PAD), lambda i: (0, 0)), # w2: resident
                pl.BlockSpec((1, O_PAD), lambda i: (0, 0)),     # b2: resident
            ],
            out_specs=pl.BlockSpec((TB, O_PAD), lambda i: (i, 0)),
        ),
        compiler_params=pltpu.CompilerParams(
            dimension_semantics=("parallel",),
        ),
    )(x, w1_p, b1_p, w2_p, b2_p)

    # Drop the padded (all-zero) output columns; tiny slice, cast back to f32
    # to match the module's output dtype.
    return out_padded[:, :num_outputs].astype(jnp.float32)


def init_params(key):
    """Deterministic init mirroring PyTorch nn.Linear default:
    U(-1/sqrt(fan_in), 1/sqrt(fan_in)) for both weight and bias."""
    k1, k2, k3, k4 = jax.random.split(key, 4)
    bound1 = 1.0 / jnp.sqrt(jnp.float32(NUM_INPUTS))
    bound2 = 1.0 / jnp.sqrt(jnp.float32(NUM_HIDDEN))
    # Stored as (in, out) == torch weight.T
    w1 = jax.random.uniform(k1, (NUM_INPUTS, NUM_HIDDEN), jnp.float32,
                            minval=-bound1, maxval=bound1)
    b1 = jax.random.uniform(k2, (NUM_HIDDEN,), jnp.float32,
                            minval=-bound1, maxval=bound1)
    w2 = jax.random.uniform(k3, (NUM_HIDDEN, NUM_OUTPUTS), jnp.float32,
                            minval=-bound2, maxval=bound2)
    b2 = jax.random.uniform(k4, (NUM_OUTPUTS,), jnp.float32,
                            minval=-bound2, maxval=bound2)
    return w1, b1, w2, b2


if __name__ == "__main__":
    key = jax.random.PRNGKey(0)
    kx, kp = jax.random.split(key)

    batch = 8
    x = jax.random.normal(kx, (batch, NUM_INPUTS), jnp.float32)
    w1, b1, w2, b2 = init_params(kp)

    prepared = prepare_params(w1, b1, w2, b2)   # pad/cast once, outside forward
    out = net_forward(x, prepared)
    out = jax.block_until_ready(out)

    # Reference: plain f32 JAX, same math as the PyTorch module.
    # Kernel uses bf16 MXU operands + bf16 output store (f32 accumulation);
    # tanh bounds outputs to [-1, 1], so absolute error stays small.
    ref = jnp.tanh(jnp.tanh(x @ w1 + b1) @ w2 + b2)
    assert out.shape == (batch, NUM_OUTPUTS)
    assert jnp.allclose(out, ref, atol=3e-2, rtol=3e-2), (
        f"max abs diff = {jnp.max(jnp.abs(out - ref))}")

    print("KERNEL_OK")
</pallas_src>

<mosaic_0001>
module attributes {stable_mosaic.version = 11 : i64} {
  func.func @mlp_kernel(%arg0: i32, %arg1: memref<16x784xf32, #tpu.memory_space<vmem>>, %arg2: memref<784x128xbf16, #tpu.memory_space<vmem>>, %arg3: memref<1x128xf32, #tpu.memory_space<vmem>>, %arg4: memref<128x128xbf16, #tpu.memory_space<vmem>>, %arg5: memref<1x128xf32, #tpu.memory_space<vmem>>, %arg6: memref<16x128xbf16, #tpu.memory_space<vmem>>) attributes {dimension_semantics = [#tpu.dimension_semantics<parallel>], iteration_bounds = array<i64: 1>, scalar_prefetch = 0 : i64, scratch_operands = 0 : i64, tpu.core_type = #tpu.core_type<tc>, window_params = [{transform_indices = @transform_0, window_bounds = array<i64: 16, 784>}, {pipeline_mode = #tpu.pipeline_mode<synchronous>, transform_indices = @transform_1, window_bounds = array<i64: 784, 128>}, {pipeline_mode = #tpu.pipeline_mode<synchronous>, transform_indices = @transform_2, window_bounds = array<i64: 1, 128>}, {pipeline_mode = #tpu.pipeline_mode<synchronous>, transform_indices = @transform_3, window_bounds = array<i64: 128, 128>}, {pipeline_mode = #tpu.pipeline_mode<synchronous>, transform_indices = @transform_4, window_bounds = array<i64: 1, 128>}, {transform_indices = @transform_5, window_bounds = array<i64: 16, 128>}]} {
    %c0 = arith.constant 0 : index
    %c0_0 = arith.constant 0 : index
    %0 = vector.load %arg1[%c0, %c0_0] : memref<16x784xf32, #tpu.memory_space<vmem>>, vector<16x784xf32>
    %1 = arith.truncf %0 : vector<16x784xf32> to vector<16x784xbf16>
    %c0_1 = arith.constant 0 : index
    %c0_2 = arith.constant 0 : index
    %2 = vector.load %arg2[%c0_1, %c0_2] : memref<784x128xbf16, #tpu.memory_space<vmem>>, vector<784x128xbf16>
    %cst = arith.constant dense<0.000000e+00> : vector<16x128xf32>
    %3 = tpu.matmul %1, %2, %cst {dimension_numbers = #tpu.dot_dimension_numbers<[1], [0], [0], [1], [0, 0, 1, 1], [], []>} : vector<16x784xbf16>, vector<784x128xbf16>, vector<16x128xf32> -> vector<16x128xf32>
    %c0_3 = arith.constant 0 : index
    %c0_4 = arith.constant 0 : index
    %4 = vector.load %arg3[%c0_3, %c0_4] : memref<1x128xf32, #tpu.memory_space<vmem>>, vector<1x128xf32>
    %5 = vector.broadcast %4 : vector<1x128xf32> to vector<16x128xf32>
    %6 = arith.addf %3, %5 : vector<16x128xf32>
    %7 = math.tanh %6 : vector<16x128xf32>
    %8 = arith.truncf %7 : vector<16x128xf32> to vector<16x128xbf16>
    %c0_5 = arith.constant 0 : index
    %c0_6 = arith.constant 0 : index
    %9 = vector.load %arg4[%c0_5, %c0_6] : memref<128x128xbf16, #tpu.memory_space<vmem>>, vector<128x128xbf16>
    %cst_7 = arith.constant dense<0.000000e+00> : vector<16x128xf32>
    %10 = tpu.matmul %8, %9, %cst_7 {dimension_numbers = #tpu.dot_dimension_numbers<[1], [0], [0], [1], [0, 0, 1, 1], [], []>} : vector<16x128xbf16>, vector<128x128xbf16>, vector<16x128xf32> -> vector<16x128xf32>
    %c0_8 = arith.constant 0 : index
    %c0_9 = arith.constant 0 : index
    %11 = vector.load %arg5[%c0_8, %c0_9] : memref<1x128xf32, #tpu.memory_space<vmem>>, vector<1x128xf32>
    %12 = vector.broadcast %11 : vector<1x128xf32> to vector<16x128xf32>
    %13 = arith.addf %10, %12 : vector<16x128xf32>
    %14 = math.tanh %13 : vector<16x128xf32>
    %15 = arith.truncf %14 : vector<16x128xf32> to vector<16x128xbf16>
    %c0_10 = arith.constant 0 : index
    %c0_11 = arith.constant 0 : index
    %16 = vector.load %arg6[%c0_10, %c0_11] : memref<16x128xbf16, #tpu.memory_space<vmem>>, vector<16x128xbf16>
    tpu.vector_store %arg6[%c0_10, %c0_11], %15 {strides = array<i32>} : memref<16x128xbf16, #tpu.memory_space<vmem>>, vector<16x128xbf16>,
    return
  }
  func.func @transform_0(%arg0: i32) -> (i32, i32) {
    %c0_i32 = arith.constant 0 : i32
    %c0_i32_0 = arith.constant 0 : i32
    return %arg0, %c0_i32 : i32, i32
  }
  func.func @transform_1(%arg0: i32) -> (i32, i32) {
    %c0_i32 = arith.constant 0 : i32
    %c0_i32_0 = arith.constant 0 : i32
    %c0_i32_1 = arith.constant 0 : i32
    return %c0_i32, %c0_i32_0 : i32, i32
  }
  func.func @transform_2(%arg0: i32) -> (i32, i32) {
    %c0_i32 = arith.constant 0 : i32
    %c0_i32_0 = arith.constant 0 : i32
    %c0_i32_1 = arith.constant 0 : i32
    return %c0_i32, %c0_i32_0 : i32, i32
  }
  func.func @transform_3(%arg0: i32) -> (i32, i32) {
    %c0_i32 = arith.constant 0 : i32
    %c0_i32_0 = arith.constant 0 : i32
    %c0_i32_1 = arith.constant 0 : i32
    return %c0_i32, %c0_i32_0 : i32, i32
  }
  func.func @transform_4(%arg0: i32) -> (i32, i32) {
    %c0_i32 = arith.constant 0 : i32
    %c0_i32_0 = arith.constant 0 : i32
    %c0_i32_1 = arith.constant 0 : i32
    return %c0_i32, %c0_i32_0 : i32, i32
  }
  func.func @transform_5(%arg0: i32) -> (i32, i32) {
    %c0_i32 = arith.constant 0 : i32
    %c0_i32_0 = arith.constant 0 : i32
    return %arg0, %c0_i32 : i32, i32
  }
}

</mosaic_0001>

<llo_original>
// kernel: tpu_custom_call.1
$region0: #{tpu_custom_call.1}
  #allocation0 [shape = 'u32[]', space=smem, size = 0x4, offset = 0x4, fixed_abs, tag = 'smem constant byte address 0x4 - core index']
  #allocation1 [shape = 'u32[144,128]{1,0:T(1,128)}', space=vmem, size = 0x12000, scoped, tag = 'internal scratch']
  %s0 = inlined_call_operand.hbm [shape: f32[8,784], index: 0, kind: input, shape index: {}]
  %s1 = inlined_call_operand.hbm [shape: bf16[784,128], index: 1, kind: input, shape index: {}]
  %s2 = inlined_call_operand.vmem [shape: f32[1,128], index: 2, kind: input, shape index: {}]
  %s3 = inlined_call_operand.hbm [shape: bf16[128,128], index: 3, kind: input, shape index: {}]
  %s4 = inlined_call_operand.vmem [shape: f32[1,128], index: 4, kind: input, shape index: {}]
  %s5 = inlined_call_operand.hbm [shape: bf16[8,128], index: 5, kind: output, shape index: {}]
  %s6 = sld [smem:[#allocation0]]
  $region42: #{tpu_custom_call.1} parent=0
    _
  %s8 = ssub.s32 1, %s6
  %s9 = scalar_select 0, %s8, %s6
  $region1: #{tpu_custom_call.1} parent=0
    #allocation2 [shape = 'u8[57344]{0}', space=vmem, size = 0xe000, scoped, tag = 'input window, operand 0, single buffered']
    #allocation3 [shape = 's32[1]{0}', space=sflag, size = 0x4, scoped, tag = 'scoped memory for tpu_custom_call.1']
    #allocation4 [shape = 's32[1]{0}', space=sflag, size = 0x4, scoped, tag = 'scoped memory for tpu_custom_call.1']
    #allocation5 [shape = 'u8[200704]{0}', space=vmem, size = 0x31000, scoped, tag = 'input window, operand 1, single buffered']
    #allocation6 [shape = 's32[1]{0}', space=sflag, size = 0x4, scoped, tag = 'scoped memory for tpu_custom_call.1']
    #allocation7 [shape = 'u8[32768]{0}', space=vmem, size = 0x8000, scoped, tag = 'input window, operand 3, single buffered']
    #allocation8 [shape = 'u8[4096]{0}', space=vmem, size = 0x1000, scoped, tag = 'output window, operand 0, single buffered']
    %10 = vsyncpa [#allocation3], 0
    %11 = vsyncpa [#allocation6], 0
    %12 = vsyncpa [#allocation4], 0
    // Predicated region
    $region2: #{tpu_custom_call.1} parent=1 // pred_check
      _
    $region3: #{tpu_custom_call.1} parent=1 // pred_check_branch
      %14 = sbr.rel (0) target = $region5
    $region4: #{tpu_custom_call.1} parent=1 // pred_region
      %s16 = ssub.s32 1792, 896
      %17 = vsyncadd [#allocation3], %s16
      %s18 = sshll.u32 [#allocation2], 4
      %s19 = int_to_ptr.vmem [resolvable:$true] %s18
      %24 = dma.hbm_to_vmem [thread:$0]  %s0, 896, %s19, [#allocation3], 896, 896, 56
    $region5: #{tpu_custom_call.1} parent=1 // pred_fallthru
      _
    // Predicated region
    $region6: #{tpu_custom_call.1} parent=1 // pred_check
      _
    $region7: #{tpu_custom_call.1} parent=1 // pred_check_branch
      %26 = sbr.rel (0) target = $region9
    $region8: #{tpu_custom_call.1} parent=1 // pred_region
      %s28 = ssub.s32 6272, 6272
      %29 = vsyncadd [#allocation6], %s28
      %s30 = sshll.u32 [#allocation5], 4
      %s31 = int_to_ptr.vmem [resolvable:$true] %s30
      %36 = dma.hbm_to_vmem [thread:$0]  %s1, 6272, %s31, [#allocation6], 64, 64, 4
    $region9: #{tpu_custom_call.1} parent=1 // pred_fallthru
      _
    // Predicated region
    $region10: #{tpu_custom_call.1} parent=1 // pred_check
      _
    $region11: #{tpu_custom_call.1} parent=1 // pred_check_branch
      %38 = sbr.rel (0) target = $region13
    $region12: #{tpu_custom_call.1} parent=1 // pred_region
      _
    $region13: #{tpu_custom_call.1} parent=1 // pred_fallthru
      _
    // Predicated region
    $region14: #{tpu_custom_call.1} parent=1 // pred_check
      _
    $region15: #{tpu_custom_call.1} parent=1 // pred_check_branch
      %40 = sbr.rel (0) target = $region17
    $region16: #{tpu_custom_call.1} parent=1 // pred_region
      %s42 = ssub.s32 1024, 1024
      %43 = vsyncadd [#allocation6], %s42
      %s44 = sshll.u32 [#allocation7], 4
      %s45 = int_to_ptr.vmem [resolvable:$true] %s44
      %50 = dma.hbm_to_vmem [thread:$0]  %s3, 1024, %s45, [#allocation6], 64, 64, 4
    $region17: #{tpu_custom_call.1} parent=1 // pred_fallthru
      _
    // Predicated region
    $region18: #{tpu_custom_call.1} parent=1 // pred_check
      _
    $region19: #{tpu_custom_call.1} parent=1 // pred_check_branch
      %52 = sbr.rel (0) target = $region21
    $region20: #{tpu_custom_call.1} parent=1 // pred_region
      _
    $region21: #{tpu_custom_call.1} parent=1 // pred_fallthru
      _
    // Predicated region
    $region22: #{tpu_custom_call.1} parent=1 // pred_check
      _
    $region23: #{tpu_custom_call.1} parent=1 // pred_check_branch
      %54 = sbr.rel (0) target = $region25
    $region24: #{tpu_custom_call.1} parent=1 // pred_region
      %55 = dma.done [#allocation3], 1792
    $region25: #{tpu_custom_call.1} parent=1 // pred_fallthru
      _
    // Predicated region
    $region26: #{tpu_custom_call.1} parent=1 // pred_check
      _
    $region27: #{tpu_custom_call.1} parent=1 // pred_check_branch
      %57 = sbr.rel (0) target = $region29
    $region28: #{tpu_custom_call.1} parent=1 // pred_region
      %58 = dma.done [#allocation6], 6272
    $region29: #{tpu_custom_call.1} parent=1 // pred_fallthru
      _
    // Predicated region
    $region30: #{tpu_custom_call.1} parent=1 // pred_check
      _
    $region31: #{tpu_custom_call.1} parent=1 // pred_check_branch
      %60 = sbr.rel (0) target = $region33
    $region32: #{tpu_custom_call.1} parent=1 // pred_region
      %61 = dma.done [#allocation6], 1024
    $region33: #{tpu_custom_call.1} parent=1 // pred_fallthru
      _
    %v63 = vld [vmem:[#allocation2] sm:$0xff]
    %v64 = vld [vmem:[#allocation2 + $0x8] sm:$0xff]
    %v65 = vld [vmem:[#allocation2 + $0x10] sm:$0xff]
    %v66 = vld [vmem:[#allocation2 + $0x18] sm:$0xff]
    %v67 = vld [vmem:[#allocation2 + $0x20] sm:$0xff]
    %v68 = vld [vmem:[#allocation2 + $0x28] sm:$0xff]
    %v69 = vld [vmem:[#allocation2 + $0x30] sm:$0xff]
    %v70 = vld [vmem:[#allocation2 + $0x38] sm:$0xff]
    %v71 = vld [vmem:[#allocation2 + $0x40] sm:$0xff]
    %v72 = vld [vmem:[#allocation2 + $0x48] sm:$0xff]
    %v73 = vld [vmem:[#allocation2 + $0x50] sm:$0xff]
    %v74 = vld [vmem:[#allocation2 + $0x58] sm:$0xff]
    %v75 = vld [vmem:[#allocation2 + $0x60] sm:$0xff]
    %v76 = vld [vmem:[#allocation2 + $0x68] sm:$0xff]
    %v77 = vpack.c.bf16 %v70, %v63
    %v78 = vpack.c.bf16 %v71, %v64
    %v79 = vpack.c.bf16 %v72, %v65
    %v80 = vpack.c.bf16 %v73, %v66
    %v81 = vpack.c.bf16 %v74, %v67
    %v82 = vpack.c.bf16 %v75, %v68
    %v83 = vpack.c.bf16 %v76, %v69
    %v84 = vld [vmem:[#allocation5] sm:$0xf]
    %v85 = vld [vmem:[#allocation5 + $0x4] sm:$0xf]
    %v86 = vld [vmem:[#allocation5 + $0x8] sm:$0xf]
    %v87 = vld [vmem:[#allocation5 + $0xc] sm:$0xf]
    %v88 = vld [vmem:[#allocation5 + $0x10] sm:$0xf]
    %v89 = vld [vmem:[#allocation5 + $0x14] sm:$0xf]
    %v90 = vld [vmem:[#allocation5 + $0x18] sm:$0xf]
    %v91 = vld [vmem:[#allocation5 + $0x1c] sm:$0xf]
    %v92 = vld [vmem:[#allocation5 + $0x20] sm:$0xf]
    %v93 = vld [vmem:[#allocation5 + $0x24] sm:$0xf]
    %v94 = vld [vmem:[#allocation5 + $0x28] sm:$0xf]
    %v95 = vld [vmem:[#allocation5 + $0x2c] sm:$0xf]
    %v96 = vld [vmem:[#allocation5 + $0x30] sm:$0xf]
    %v97 = vld [vmem:[#allocation5 + $0x34] sm:$0xf]
    %v98 = vld [vmem:[#allocation5 + $0x38] sm:$0xf]
    %v99 = vld [vmem:[#allocation5 + $0x3c] sm:$0xf]
    %v100 = vld [vmem:[#allocation5 + $0x40] sm:$0xf]
    %v101 = vld [vmem:[#allocation5 + $0x44] sm:$0xf]
    %v102 = vld [vmem:[#allocation5 + $0x48] sm:$0xf]
    %v103 = vld [vmem:[#allocation5 + $0x4c] sm:$0xf]
    %v104 = vld [vmem:[#allocation5 + $0x50] sm:$0xf]
    %v105 = vld [vmem:[#allocation5 + $0x54] sm:$0xf]
    %v106 = vld [vmem:[#allocation5 + $0x58] sm:$0xf]
    %v107 = vld [vmem:[#allocation5 + $0x5c] sm:$0xf]
    %v108 = vld [vmem:[#allocation5 + $0x60] sm:$0xf]
    %v109 = vld [vmem:[#allocation5 + $0x64] sm:$0xf]
    %v110 = vld [vmem:[#allocation5 + $0x68] sm:$0xf]
    %v111 = vld [vmem:[#allocation5 + $0x6c] sm:$0xf]
    %v112 = vld [vmem:[#allocation5 + $0x70] sm:$0xf]
    %v113 = vld [vmem:[#allocation5 + $0x74] sm:$0xf]
    %v114 = vld [vmem:[#allocation5 + $0x78] sm:$0xf]
    %v115 = vld [vmem:[#allocation5 + $0x7c] sm:$0xf]
    %v116 = vld [vmem:[#allocation5 + $0x80] sm:$0xf]
    %v117 = vld [vmem:[#allocation5 + $0x84] sm:$0xf]
    %v118 = vld [vmem:[#allocation5 + $0x88] sm:$0xf]
    %v119 = vld [vmem:[#allocation5 + $0x8c] sm:$0xf]
    %v120 = vld [vmem:[#allocation5 + $0x90] sm:$0xf]
    %v121 = vld [vmem:[#allocation5 + $0x94] sm:$0xf]
    %v122 = vld [vmem:[#allocation5 + $0x98] sm:$0xf]
    %v123 = vld [vmem:[#allocation5 + $0x9c] sm:$0xf]
    %v124 = vld [vmem:[#allocation5 + $0xa0] sm:$0xf]
    %v125 = vld [vmem:[#allocation5 + $0xa4] sm:$0xf]
    %v126 = vld [vmem:[#allocation5 + $0xa8] sm:$0xf]
    %v127 = vld [vmem:[#allocation5 + $0xac] sm:$0xf]
    %v128 = vld [vmem:[#allocation5 + $0xb0] sm:$0xf]
    %v129 = vld [vmem:[#allocation5 + $0xb4] sm:$0xf]
    %v130 = vld [vmem:[#allocation5 + $0xb8] sm:$0xf]
    %v131 = vld [vmem:[#allocation5 + $0xbc] sm:$0xf]
    %v132 = vld [vmem:[#allocation5 + $0xc0] sm:$0xf]
    %v133 = vld [vmem:[#allocation5 + $0xc4] sm:$0xf]
    %v134 = vld [vmem:[#allocation5 + $0xc8] sm:$0xf]
    %v135 = vld [vmem:[#allocation5 + $0xcc] sm:$0xf]
    %v136 = vld [vmem:[#allocation5 + $0xd0] sm:$0xf]
    %v137 = vld [vmem:[#allocation5 + $0xd4] sm:$0xf]
    %v138 = vld [vmem:[#allocation5 + $0xd8] sm:$0xf]
    %v139 = vld [vmem:[#allocation5 + $0xdc] sm:$0xf]
    %v140 = vld [vmem:[#allocation5 + $0xe0] sm:$0xf]
    %v141 = vld [vmem:[#allocation5 + $0xe4] sm:$0xf]
    %v142 = vld [vmem:[#allocation5 + $0xe8] sm:$0xf]
    %v143 = vld [vmem:[#allocation5 + $0xec] sm:$0xf]
    %v144 = vld [vmem:[#allocation5 + $0xf0] sm:$0xf]
    %v145 = vld [vmem:[#allocation5 + $0xf4] sm:$0xf]
    %v146 = vld [vmem:[#allocation5 + $0xf8] sm:$0xf]
    %v147 = vld [vmem:[#allocation5 + $0xfc] sm:$0xf]
    %v148 = vld [vmem:[#allocation5 + $0x100] sm:$0xf]
    %v149 = vld [vmem:[#allocation5 + $0x104] sm:$0xf]
    %v150 = vld [vmem:[#allocation5 + $0x108] sm:$0xf]
    %v151 = vld [vmem:[#allocation5 + $0x10c] sm:$0xf]
    %v152 = vld [vmem:[#allocation5 + $0x110] sm:$0xf]
    %v153 = vld [vmem:[#allocation5 + $0x114] sm:$0xf]
    %v154 = vld [vmem:[#allocation5 + $0x118] sm:$0xf]
    %v155 = vld [vmem:[#allocation5 + $0x11c] sm:$0xf]
    %v156 = vld [vmem:[#allocation5 + $0x120] sm:$0xf]
    %v157 = vld [vmem:[#allocation5 + $0x124] sm:$0xf]
    %v158 = vld [vmem:[#allocation5 + $0x128] sm:$0xf]
    %v159 = vld [vmem:[#allocation5 + $0x12c] sm:$0xf]
    %v160 = vld [vmem:[#allocation5 + $0x130] sm:$0xf]
    %v161 = vld [vmem:[#allocation5 + $0x134] sm:$0xf]
    %v162 = vld [vmem:[#allocation5 + $0x138] sm:$0xf]
    %v163 = vld [vmem:[#allocation5 + $0x13c] sm:$0xf]
    %v164 = vld [vmem:[#allocation5 + $0x140] sm:$0xf]
    %v165 = vld [vmem:[#allocation5 + $0x144] sm:$0xf]
    %v166 = vld [vmem:[#allocation5 + $0x148] sm:$0xf]
    %v167 = vld [vmem:[#allocation5 + $0x14c] sm:$0xf]
    %v168 = vld [vmem:[#allocation5 + $0x150] sm:$0xf]
    %v169 = vld [vmem:[#allocation5 + $0x154] sm:$0xf]
    %v170 = vld [vmem:[#allocation5 + $0x158] sm:$0xf]
    %v171 = vld [vmem:[#allocation5 + $0x15c] sm:$0xf]
    %v172 = vld [vmem:[#allocation5 + $0x160] sm:$0xf]
    %v173 = vld [vmem:[#allocation5 + $0x164] sm:$0xf]
    %v174 = vld [vmem:[#allocation5 + $0x168] sm:$0xf]
    %v175 = vld [vmem:[#allocation5 + $0x16c] sm:$0xf]
    %v176 = vld [vmem:[#allocation5 + $0x170] sm:$0xf]
    %v177 = vld [vmem:[#allocation5 + $0x174] sm:$0xf]
    %v178 = vld [vmem:[#allocation5 + $0x178] sm:$0xf]
    %v179 = vld [vmem:[#allocation5 + $0x17c] sm:$0xf]
    %v180 = vld [vmem:[#allocation5 + $0x180] sm:$0xf]
    %v181 = vld [vmem:[#allocation5 + $0x184] sm:$0xf]
    %v182 = vld [vmem:[%s2] sm:$0x1]
    %v184 = vlaneseq
    %v185 = vshrl.u32 %v184, 7
    %v186 = vsub.s32 0, %v185
    %v187 = vrot.slane %v182, %v186
    %v287 = vunpack.c.l.b16 %v84
    %v288 = vunpack.c.l.b16 %v85
    %v289 = vunpack.c.l.b16 %v86
    %v290 = vunpack.c.l.b16 %v87
    %v291 = vunpack.c.l.b16 %v88
    %v292 = vunpack.c.l.b16 %v89
    %v293 = vunpack.c.l.b16 %v90
    %v294 = vunpack.c.l.b16 %v91
    %v295 = vunpack.c.l.b16 %v92
    %v296 = vunpack.c.l.b16 %v93
    %v297 = vunpack.c.l.b16 %v94
    %v298 = vunpack.c.l.b16 %v95
    %v299 = vunpack.c.l.b16 %v96
    %v300 = vunpack.c.l.b16 %v97
    %v301 = vunpack.c.l.b16 %v98
    %v302 = vunpack.c.l.b16 %v99
    %v303 = vunpack.c.l.b16 %v100
    %v304 = vunpack.c.l.b16 %v101
    %v305 = vunpack.c.l.b16 %v102
    %v306 = vunpack.c.l.b16 %v103
    %v307 = vunpack.c.l.b16 %v104
    %v308 = vunpack.c.l.b16 %v105
    %v309 = vunpack.c.l.b16 %v106
    %v310 = vunpack.c.l.b16 %v107
    %v311 = vunpack.c.l.b16 %v108
    %v312 = vunpack.c.l.b16 %v109
    %v313 = vunpack.c.l.b16 %v110
    %v314 = vunpack.c.l.b16 %v111
    %v315 = vunpack.c.l.b16 %v112
    %v316 = vunpack.c.l.b16 %v113
    %v317 = vunpack.c.l.b16 %v114
    %v318 = vunpack.c.l.b16 %v115
    %v319 = vunpack.c.l.b16 %v116
    %v320 = vunpack.c.l.b16 %v117
    %v321 = vunpack.c.l.b16 %v118
    %v322 = vunpack.c.l.b16 %v119
    %v323 = vunpack.c.l.b16 %v120
    %v324 = vunpack.c.l.b16 %v121
    %v325 = vunpack.c.l.b16 %v122
    %v326 = vunpack.c.l.b16 %v123
    %v327 = vunpack.c.l.b16 %v124
    %v328 = vunpack.c.l.b16 %v125
    %v329 = vunpack.c.l.b16 %v126
    %v330 = vunpack.c.l.b16 %v127
    %v331 = vunpack.c.l.b16 %v128
    %v332 = vunpack.c.l.b16 %v129
    %v333 = vunpack.c.l.b16 %v130
    %v334 = vunpack.c.l.b16 %v131
    %v335 = vunpack.c.l.b16 %v132
    %v336 = vunpack.c.l.b16 %v133
    %v337 = vunpack.c.l.b16 %v134
    %v338 = vunpack.c.l.b16 %v135
    %v339 = vunpack.c.l.b16 %v136
    %v340 = vunpack.c.l.b16 %v137
    %v341 = vunpack.c.l.b16 %v138
    %v342 = vunpack.c.l.b16 %v139
    %v343 = vunpack.c.l.b16 %v140
    %v344 = vunpack.c.l.b16 %v141
    %v345 = vunpack.c.l.b16 %v142
    %v346 = vunpack.c.l.b16 %v143
    %v347 = vunpack.c.l.b16 %v144
    %v348 = vunpack.c.l.b16 %v145
    %v349 = vunpack.c.l.b16 %v146
    %v350 = vunpack.c.l.b16 %v147
    %v351 = vunpack.c.l.b16 %v148
    %v352 = vunpack.c.l.b16 %v149
    %v353 = vunpack.c.l.b16 %v150
    %v354 = vunpack.c.l.b16 %v151
    %v355 = vunpack.c.l.b16 %v152
    %v356 = vunpack.c.l.b16 %v153
    %v357 = vunpack.c.l.b16 %v154
    %v358 = vunpack.c.l.b16 %v155
    %v359 = vunpack.c.l.b16 %v156
    %v360 = vunpack.c.l.b16 %v157
    %v361 = vunpack.c.l.b16 %v158
    %v362 = vunpack.c.l.b16 %v159
    %v363 = vunpack.c.l.b16 %v160
    %v364 = vunpack.c.l.b16 %v161
    %v365 = vunpack.c.l.b16 %v162
    %v366 = vunpack.c.l.b16 %v163
    %v367 = vunpack.c.l.b16 %v164
    %v368 = vunpack.c.l.b16 %v165
    %v369 = vunpack.c.l.b16 %v166
    %v370 = vunpack.c.l.b16 %v167
    %v371 = vunpack.c.l.b16 %v168
    %v372 = vunpack.c.l.b16 %v169
    %v373 = vunpack.c.l.b16 %v170
    %v374 = vunpack.c.l.b16 %v171
    %v375 = vunpack.c.l.b16 %v172
    %v376 = vunpack.c.l.b16 %v173
    %v377 = vunpack.c.l.b16 %v174
    %v378 = vunpack.c.l.b16 %v175
    %v379 = vunpack.c.l.b16 %v176
    %v380 = vunpack.c.l.b16 %v177
    %v381 = vunpack.c.l.b16 %v178
    %v382 = vunpack.c.l.b16 %v179
    %v383 = vunpack.c.l.b16 %v180
    %v384 = vunpack.c.l.b16 %v181
    %v385 = vpack.c.b16 %v288, %v287
    %v386 = vpack.c.b16 %v290, %v289
    %v387 = vpack.c.b16 %v292, %v291
    %v388 = vpack.c.b16 %v294, %v293
    %v389 = vpack.c.b16 %v296, %v295
    %v390 = vpack.c.b16 %v298, %v297
    %v391 = vpack.c.b16 %v300, %v299
    %v392 = vpack.c.b16 %v302, %v301
    %v393 = vpack.c.b16 %v304, %v303
    %v394 = vpack.c.b16 %v306, %v305
    %v395 = vpack.c.b16 %v308, %v307
    %v396 = vpack.c.b16 %v310, %v309
    %v397 = vpack.c.b16 %v312, %v311
    %v398 = vpack.c.b16 %v314, %v313
    %v399 = vpack.c.b16 %v316, %v315
    %v400 = vpack.c.b16 %v318, %v317
    %v401 = vpack.c.b16 %v320, %v319
    %v402 = vpack.c.b16 %v322, %v321
    %v403 = vpack.c.b16 %v324, %v323
    %v404 = vpack.c.b16 %v326, %v325
    %v405 = vpack.c.b16 %v328, %v327
    %v406 = vpack.c.b16 %v330, %v329
    %v407 = vpack.c.b16 %v332, %v331
    %v408 = vpack.c.b16 %v334, %v333
    %v409 = vpack.c.b16 %v336, %v335
    %v410 = vpack.c.b16 %v338, %v337
    %v411 = vpack.c.b16 %v340, %v339
    %v412 = vpack.c.b16 %v342, %v341
    %v413 = vpack.c.b16 %v344, %v343
    %v414 = vpack.c.b16 %v346, %v345
    %v415 = vpack.c.b16 %v348, %v347
    %v416 = vpack.c.b16 %v350, %v349
    %v417 = vpack.c.b16 %v352, %v351
    %v418 = vpack.c.b16 %v354, %v353
    %v419 = vpack.c.b16 %v356, %v355
    %v420 = vpack.c.b16 %v358, %v357
    %v421 = vpack.c.b16 %v360, %v359
    %v422 = vpack.c.b16 %v362, %v361
    %v423 = vpack.c.b16 %v364, %v363
    %v424 = vpack.c.b16 %v366, %v365
    %v425 = vpack.c.b16 %v368, %v367
    %v426 = vpack.c.b16 %v370, %v369
    %v427 = vpack.c.b16 %v372, %v371
    %v428 = vpack.c.b16 %v374, %v373
    %v429 = vpack.c.b16 %v376, %v375
    %v430 = vpack.c.b16 %v378, %v377
    %v431 = vpack.c.b16 %v380, %v379
    %v432 = vpack.c.b16 %v382, %v381
    %v433 = vpack.c.b16 %v384, %v383
    %vm483 = vcmask 130048
    %v485 = vsel %vm483, %v83, 0
    %487 = vmatprep.subr.bf16.mxu0 0
    %488 = vmatpush1.bf16.msra.mxu0 %v392
    %489 = vmatprep.subr.bf16.mxu0 0
    %490 = vmatpush1.bf16.msra.mxu0 %v391
    %491 = vmatprep.subr.bf16.mxu0 0
    %492 = vmatpush1.bf16.msra.mxu0 %v390
    %493 = vmatprep.subr.bf16.mxu0 0
    %494 = vmatpush1.bf16.msra.mxu0 %v389
    %495 = vmatprep.subr.bf16.mxu0 0
    %496 = vmatpush1.bf16.msra.mxu0 %v388
    %497 = vmatprep.subr.bf16.mxu0 0
    %498 = vmatpush1.bf16.msra.mxu0 %v387
    %499 = vmatprep.subr.bf16.mxu0 0
    %500 = vmatpush1.bf16.msra.mxu0 %v386
    %501 = vmatprep.subr.bf16.mxu0 0
    %502 = vmatpush1.bf16.msra.mxu0 %v385
    %503 = vmatprep.subr.bf16.mxu0 0
    %504 = vmatpush2.bf16.msra.mxu0 %v400
    %505 = vmatprep.subr.bf16.mxu0 0
    %506 = vmatpush2.bf16.msra.mxu0 %v399
    %507 = vmatprep.subr.bf16.mxu0 0
    %508 = vmatpush2.bf16.msra.mxu0 %v398
    %509 = vmatprep.subr.bf16.mxu0 0
    %510 = vmatpush2.bf16.msra.mxu0 %v397
    %511 = vmatprep.subr.bf16.mxu0 0
    %512 = vmatpush2.bf16.msra.mxu0 %v396
    %513 = vmatprep.subr.bf16.mxu0 0
    %514 = vmatpush2.bf16.msra.mxu0 %v395
    %515 = vmatprep.subr.bf16.mxu0 0
    %516 = vmatpush2.bf16.msra.mxu0 %v394
    %517 = vmatprep.subr.bf16.mxu0 0
    %518 = vmatpush2.bf16.msra.mxu0 %v393
    %519 = vmatprep.mubr.bf16.mxu0 %v78
    %520 = vmatmul.mubr.bf16.gmra.mxu0 %v77
    %v521 = vpop.f32.mrf.mxu0
    %v522 = vadd.f32 %v187, %v521
    %v523 = vpop.f32.mrf.mxu0
    %v524 = vpop.f32.mrf.mxu0
    %v525 = vadd.f32 %v187, %v524
    %v526 = vpop.f32.mrf.mxu0
    %527 = vdwg.mxu0
    %528 = vmatprep.subr.bf16.mxu0 0
    %529 = vmatpush1.bf16.msra.mxu0 %v408
    %530 = vmatprep.subr.bf16.mxu0 0
    %531 = vmatpush1.bf16.msra.mxu0 %v407
    %532 = vmatprep.subr.bf16.mxu0 0
    %533 = vmatpush1.bf16.msra.mxu0 %v406
    %534 = vmatprep.subr.bf16.mxu0 0
    %535 = vmatpush1.bf16.msra.mxu0 %v405
    %536 = vmatprep.subr.bf16.mxu0 0
    %537 = vmatpush1.bf16.msra.mxu0 %v404
    %538 = vmatprep.subr.bf16.mxu0 0
    %539 = vmatpush1.bf16.msra.mxu0 %v403
    %540 = vmatprep.subr.bf16.mxu0 0
    %541 = vmatpush1.bf16.msra.mxu0 %v402
    %542 = vmatprep.subr.bf16.mxu0 0
    %543 = vmatpush1.bf16.msra.mxu0 %v401
    %544 = vmatprep.subr.bf16.mxu0 0
    %545 = vmatpush2.bf16.msra.mxu0 %v416
    %546 = vmatprep.subr.bf16.mxu0 0
    %547 = vmatpush2.bf16.msra.mxu0 %v415
    %548 = vmatprep.subr.bf16.mxu0 0
    %549 = vmatpush2.bf16.msra.mxu0 %v414
    %550 = vmatprep.subr.bf16.mxu0 0
    %551 = vmatpush2.bf16.msra.mxu0 %v413
    %552 = vmatprep.subr.bf16.mxu0 0
    %553 = vmatpush2.bf16.msra.mxu0 %v412
    %554 = vmatprep.subr.bf16.mxu0 0
    %555 = vmatpush2.bf16.msra.mxu0 %v411
    %556 = vmatprep.subr.bf16.mxu0 0
    %557 = vmatpush2.bf16.msra.mxu0 %v410
    %558 = vmatprep.subr.bf16.mxu0 0
    %559 = vmatpush2.bf16.msra.mxu0 %v409
    %560 = vmatprep.mubr.bf16.mxu0 %v80
    %561 = vmatmul.mubr.bf16.gmra.mxu0 %v79
    %v562 = vpop.f32.mrf.mxu0
    %v563 = vadd.f32 %v522, %v562
    %v564 = vpop.f32.mrf.mxu0
    %v565 = vpop.f32.mrf.mxu0
    %v566 = vadd.f32 %v525, %v565
    %v567 = vpop.f32.mrf.mxu0
    %568 = vdwg.mxu0
    %569 = vmatprep.subr.bf16.mxu0 0
    %570 = vmatpush1.bf16.msra.mxu0 %v424
    %571 = vmatprep.subr.bf16.mxu0 0
    %572 = vmatpush1.bf16.msra.mxu0 %v423
    %573 = vmatprep.subr.bf16.mxu0 0
    %574 = vmatpush1.bf16.msra.mxu0 %v422
    %575 = vmatprep.subr.bf16.mxu0 0
    %576 = vmatpush1.bf16.msra.mxu0 %v421
    %577 = vmatprep.subr.bf16.mxu0 0
    %578 = vmatpush1.bf16.msra.mxu0 %v420
    %579 = vmatprep.subr.bf16.mxu0 0
    %580 = vmatpush1.bf16.msra.mxu0 %v419
    %581 = vmatprep.subr.bf16.mxu0 0
    %582 = vmatpush1.bf16.msra.mxu0 %v418
    %583 = vmatprep.subr.bf16.mxu0 0
    %584 = vmatpush1.bf16.msra.mxu0 %v417
    %585 = vmatprep.subr.bf16.mxu0 0
    %586 = vmatpush2.bf16.msra.mxu0 %v432
    %587 = vmatprep.subr.bf16.mxu0 0
    %588 = vmatpush2.bf16.msra.mxu0 %v431
    %589 = vmatprep.subr.bf16.mxu0 0
    %590 = vmatpush2.bf16.msra.mxu0 %v430
    %591 = vmatprep.subr.bf16.mxu0 0
    %592 = vmatpush2.bf16.msra.mxu0 %v429
    %593 = vmatprep.subr.bf16.mxu0 0
    %594 = vmatpush2.bf16.msra.mxu0 %v428
    %595 = vmatprep.subr.bf16.mxu0 0
    %596 = vmatpush2.bf16.msra.mxu0 %v427
    %597 = vmatprep.subr.bf16.mxu0 0
    %598 = vmatpush2.bf16.msra.mxu0 %v426
    %599 = vmatprep.subr.bf16.mxu0 0
    %600 = vmatpush2.bf16.msra.mxu0 %v425
    %601 = vmatprep.mubr.bf16.mxu0 %v82
    %602 = vmatmul.mubr.bf16.gmra.mxu0 %v81
    %v603 = vpop.f32.mrf.mxu0
    %v604 = vadd.f32 %v563, %v603
    %v605 = vpop.f32.mrf.mxu0
    %v606 = vpop.f32.mrf.mxu0
    %v607 = vadd.f32 %v566, %v606
    %v608 = vpop.f32.mrf.mxu0
    %609 = vdwg.mxu0
    %610 = vmatprep.subr.bf16.mxu0 0
    %611 = vmatpush1.bf16.msra.mxu0 0
    %612 = vmatprep.subr.bf16.mxu0 0
    %613 = vmatpush1.bf16.msra.mxu0 0
    %614 = vmatprep.subr.bf16.mxu0 0
    %615 = vmatpush1.bf16.msra.mxu0 0
    %616 = vmatprep.subr.bf16.mxu0 0
    %617 = vmatpush1.bf16.msra.mxu0 0
    %618 = vmatprep.subr.bf16.mxu0 0
    %619 = vmatpush1.bf16.msra.mxu0 0
    %620 = vmatprep.subr.bf16.mxu0 0
    %621 = vmatpush1.bf16.msra.mxu0 0
    %622 = vmatprep.subr.bf16.mxu0 0
    %623 = vmatpush1.bf16.msra.mxu0 0
    %624 = vmatprep.subr.bf16.mxu0 0
    %625 = vmatpush1.bf16.msra.mxu0 %v433
    %626 = vmatprep.subr.bf16.mxu0 0
    %627 = vmatpush2.bf16.msra.mxu0 0
    %628 = vmatprep.subr.bf16.mxu0 0
    %629 = vmatpush2.bf16.msra.mxu0 0
    %630 = vmatprep.subr.bf16.mxu0 0
    %631 = vmatpush2.bf16.msra.mxu0 0
    %632 = vmatprep.subr.bf16.mxu0 0
    %633 = vmatpush2.bf16.msra.mxu0 0
    %634 = vmatprep.subr.bf16.mxu0 0
    %635 = vmatpush2.bf16.msra.mxu0 0
    %636 = vmatprep.subr.bf16.mxu0 0
    %637 = vmatpush2.bf16.msra.mxu0 0
    %638 = vmatprep.subr.bf16.mxu0 0
    %639 = vmatpush2.bf16.msra.mxu0 0
    %640 = vmatprep.subr.bf16.mxu0 0
    %641 = vmatpush2.bf16.msra.mxu0 0
    %642 = vmatprep.mubr.bf16.mxu0 0
    %643 = vmatmul.mubr.bf16.gmra.mxu0 %v485
    %v644 = vpop.f32.mrf.mxu0
    %v645 = vadd.f32 %v604, %v644
    %v646 = vpop.f32.mrf.mxu0
    %v647 = vpop.f32.mrf.mxu0
    %v648 = vadd.f32 %v607, %v647
    %v649 = vpop.f32.mrf.mxu0
    %650 = vdwg.mxu0
    %v651 = vtanh.pop %v645
    %v652 = vtanh.pop %v648
    %v653 = vpack.c.bf16 %v652, %v651
    %v654 = vld [vmem:[#allocation7] sm:$0xf]
    %v655 = vld [vmem:[#allocation7 + $0x4] sm:$0xf]
    %v656 = vld [vmem:[#allocation7 + $0x8] sm:$0xf]
    %v657 = vld [vmem:[#allocation7 + $0xc] sm:$0xf]
    %v658 = vld [vmem:[#allocation7 + $0x10] sm:$0xf]
    %v659 = vld [vmem:[#allocation7 + $0x14] sm:$0xf]
    %v660 = vld [vmem:[#allocation7 + $0x18] sm:$0xf]
    %v661 = vld [vmem:[#allocation7 + $0x1c] sm:$0xf]
    %v662 = vld [vmem:[#allocation7 + $0x20] sm:$0xf]
    %v663 = vld [vmem:[#allocation7 + $0x24] sm:$0xf]
    %v664 = vld [vmem:[#allocation7 + $0x28] sm:$0xf]
    %v665 = vld [vmem:[#allocation7 + $0x2c] sm:$0xf]
    %v666 = vld [vmem:[#allocation7 + $0x30] sm:$0xf]
    %v667 = vld [vmem:[#allocation7 + $0x34] sm:$0xf]
    %v668 = vld [vmem:[#allocation7 + $0x38] sm:$0xf]
    %v669 = vld [vmem:[#allocation7 + $0x3c] sm:$0xf]
    %v670 = vld [vmem:[%s4] sm:$0x1]
    %v672 = vlaneseq
    %v673 = vshrl.u32 %v672, 7
    %v674 = vsub.s32 0, %v673
    %v675 = vrot.slane %v670, %v674
    %v693 = vunpack.c.l.b16 %v654
    %v694 = vunpack.c.l.b16 %v655
    %v695 = vunpack.c.l.b16 %v656
    %v696 = vunpack.c.l.b16 %v657
    %v697 = vunpack.c.l.b16 %v658
    %v698 = vunpack.c.l.b16 %v659
    %v699 = vunpack.c.l.b16 %v660
    %v700 = vunpack.c.l.b16 %v661
    %v701 = vunpack.c.l.b16 %v662
    %v702 = vunpack.c.l.b16 %v663
    %v703 = vunpack.c.l.b16 %v664
    %v704 = vunpack.c.l.b16 %v665
    %v705 = vunpack.c.l.b16 %v666
    %v706 = vunpack.c.l.b16 %v667
    %v707 = vunpack.c.l.b16 %v668
    %v708 = vunpack.c.l.b16 %v669
    %v709 = vpack.c.b16 %v694, %v693
    %v710 = vpack.c.b16 %v696, %v695
    %v711 = vpack.c.b16 %v698, %v697
    %v712 = vpack.c.b16 %v700, %v699
    %v713 = vpack.c.b16 %v702, %v701
    %v714 = vpack.c.b16 %v704, %v703
    %v715 = vpack.c.b16 %v706, %v705
    %v716 = vpack.c.b16 %v708, %v707
    %725 = vmatprep.subr.bf16.mxu0 0
    %726 = vmatpush1.bf16.msra.mxu0 %v716
    %727 = vmatprep.subr.bf16.mxu0 0
    %728 = vmatpush1.bf16.msra.mxu0 %v715
    %729 = vmatprep.subr.bf16.mxu0 0
    %730 = vmatpush1.bf16.msra.mxu0 %v714
    %731 = vmatprep.subr.bf16.mxu0 0
    %732 = vmatpush1.bf16.msra.mxu0 %v713
    %733 = vmatprep.subr.bf16.mxu0 0
    %734 = vmatpush1.bf16.msra.mxu0 %v712
    %735 = vmatprep.subr.bf16.mxu0 0
    %736 = vmatpush1.bf16.msra.mxu0 %v711
    %737 = vmatprep.subr.bf16.mxu0 0
    %738 = vmatpush1.bf16.msra.mxu0 %v710
    %739 = vmatprep.subr.bf16.mxu0 0
    %740 = vmatpush1.bf16.msra.mxu0 %v709
    %741 = vmatprep.subr.bf16.mxu0 0
    %742 = vmatpush2.bf16.msra.mxu0 0
    %743 = vmatprep.subr.bf16.mxu0 0
    %744 = vmatpush2.bf16.msra.mxu0 0
    %745 = vmatprep.subr.bf16.mxu0 0
    %746 = vmatpush2.bf16.msra.mxu0 0
    %747 = vmatprep.subr.bf16.mxu0 0
    %748 = vmatpush2.bf16.msra.mxu0 0
    %749 = vmatprep.subr.bf16.mxu0 0
    %750 = vmatpush2.bf16.msra.mxu0 0
    %751 = vmatprep.subr.bf16.mxu0 0
    %752 = vmatpush2.bf16.msra.mxu0 0
    %753 = vmatprep.subr.bf16.mxu0 0
    %754 = vmatpush2.bf16.msra.mxu0 0
    %755 = vmatprep.subr.bf16.mxu0 0
    %756 = vmatpush2.bf16.msra.mxu0 0
    %757 = vmatprep.mubr.bf16.mxu0 0
    %758 = vmatmul.mubr.bf16.gmra.mxu0 %v653
    %v759 = vpop.f32.mrf.mxu0
    %v760 = vadd.f32 %v675, %v759
    %v761 = vpop.f32.mrf.mxu0
    %v762 = vpop.f32.mrf.mxu0
    %v763 = vadd.f32 %v675, %v762
    %v764 = vpop.f32.mrf.mxu0
    %765 = vdwg.mxu0
    %v766 = vtanh.pop %v760
    %v767 = vtanh.pop %v763
    %v768 = vpack.c.bf16 %v767, %v766
    %v770 = vunpack.c.l.b16 %v768
    %v771 = vunpack.c.h.b16 %v768
    %v772 = vpack.c.b16 %v770, %v770
    %v773 = vpack.c.b16 %v771, %v771
    %776 = vst [vmem:[#allocation8] sm:$0xf] %v772
    %777 = vst [vmem:[#allocation8 + $0x4] sm:$0xf] %v773
    // Predicated region
    $region34: #{tpu_custom_call.1} parent=1 // pred_check
      _
    $region35: #{tpu_custom_call.1} parent=1 // pred_check_branch
      %779 = sbr.rel (0) target = $region37
    $region36: #{tpu_custom_call.1} parent=1 // pred_region
      %s781 = ssub.s32 128, 64
      %782 = vsyncadd [#allocation4], %s781
      %s783 = sshll.u32 [#allocation8], 4
      %s784 = int_to_ptr.vmem [resolvable:$true] %s783
      %789 = dma.vmem_to_hbm [thread:$0]  %s784, 64, %s5, [#allocation4], 64, 64, 4
    $region37: #{tpu_custom_call.1} parent=1 // pred_fallthru
      _
    // Predicated region
    $region38: #{tpu_custom_call.1} parent=1 // pred_check
      _
    $region39: #{tpu_custom_call.1} parent=1 // pred_check_branch
      %791 = sbr.rel (0) target = $region41
    $region40: #{tpu_custom_call.1} parent=1 // pred_region
      %792 = dma.done [#allocation4], 128
    $region41: #{tpu_custom_call.1} parent=1 // pred_fallthru
      _
    %793 = vsyncpa [#allocation3], 1
    %794 = vsyncpa [#allocation6], 1
    %795 = vsyncpa [#allocation4], 1

</llo_original>
